<compile_context>
chip_gen: v6e
topology: v6e:2x2x1
jax: 0.10.0
libtpu: 0.0.40
codegen_flags: <defaults>
</compile_context>

<pallas_src>
import math
from functools import partial

import jax
import jax.numpy as jnp
from jax.experimental import pallas as pl
from jax.experimental.pallas import tpu as pltpu


def _round_up(x, m):
    return ((x + m - 1) // m) * m


# ---------------------------------------------------------------------------
# Kernel 1: H = X @ W  (tiny one-pass projection; emits bf16, lane-dense F_out)
# ---------------------------------------------------------------------------
def _xw_kernel(x_ref, w_ref, h_ref):
    h_ref[...] = jnp.dot(
        x_ref[...], w_ref[...], preferred_element_type=jnp.float32
    ).astype(h_ref.dtype)


# ---------------------------------------------------------------------------
# Kernel 2a: out = A @ H with H fully VMEM-resident (DMA'd from HBM once).
# ---------------------------------------------------------------------------
def _agg_resident_kernel(tk, adj_ref, h_ref, out_ref):
    k = pl.program_id(1)

    @pl.when(k == 0)
    def _():
        out_ref[...] = jnp.zeros_like(out_ref)

    ks = pl.multiple_of(k * tk, tk)
    # Native bf16 MXU path; f32 accumulation directly into the resident output
    # block (output block index is constant across the reduction axis).
    out_ref[...] += jnp.dot(
        adj_ref[...],
        h_ref[pl.ds(ks, tk), :],
        preferred_element_type=jnp.float32,
    )


# ---------------------------------------------------------------------------
# Kernel 2b: fallback when H does not fit in VMEM; H is streamed per k tile.
# ---------------------------------------------------------------------------
def _agg_tiled_kernel(adj_ref, h_ref, out_ref):
    k = pl.program_id(1)

    @pl.when(k == 0)
    def _():
        out_ref[...] = jnp.zeros_like(out_ref)

    out_ref[...] += jnp.dot(
        adj_ref[...], h_ref[...], preferred_element_type=jnp.float32
    )


_VMEM_BUDGET = 40 << 20  # keep well under v7x's 64 MiB physical VMEM


def _step2_vmem_bytes(tm, tk, k_p, f_out_p, h_resident):
    adj = 2 * tm * tk * 2                                # bf16 adjacency, 2 bufs
    out = 2 * tm * f_out_p * 4                           # f32 output tile
    h = 2 * (k_p if h_resident else tk) * f_out_p * 2    # bf16 H
    return adj + out + h


def graphsage_conv(node_features, adjacency_matrix, W, *, tm=512, tk=2048):
    """out = (adjacency @ node_features) @ W, computed as adjacency @ (node_features @ W)."""
    N, f_in = node_features.shape
    f_out = W.shape[1]
    assert adjacency_matrix.shape == (N, N)
    assert W.shape[0] == f_in
    out_dtype = node_features.dtype
    f32 = jnp.float32

    # ---- tiled geometry (kept at (8,128)-friendly sizes) --------------------
    n128 = _round_up(N, 128)
    f_in_p = _round_up(max(f_in, 128), 128)    # lane-dense contraction dim of X @ W
    f_out_p = _round_up(max(f_out, 128), 128)  # lane-dense output (unmasked vst)
    # TODO(synk): for f_out_p > ~512 add an output-column grid axis instead of
    # a single wide accumulator block.
    tm = min(tm, n128)
    tk = min(tk, n128)

    # H residency decision + explicit VMEM budget (so v7x's 64 MiB is safe).
    k_p = _round_up(N, tk)
    h_resident = _step2_vmem_bytes(tm, tk, k_p, f_out_p, True) <= _VMEM_BUDGET
    if not h_resident:
        # H will be re-streamed once per row tile; amortize with a taller tile.
        tm = min(max(tm, 1024), n128)
        while (_step2_vmem_bytes(tm, tk, _round_up(N, tk), f_out_p, False)
               > _VMEM_BUDGET and tk > 512):
            tk = max(512, _round_up(tk // 2, 128))
        k_p = _round_up(N, tk)
    m_p = _round_up(N, tm)
    vmem_limit = int(
        max(_step2_vmem_bytes(tm, tk, k_p, f_out_p, h_resident) + (4 << 20),
            32 << 20)
    )

    # ---- pad / cast (skipped when shapes are already tile-aligned) ----------
    # Zero padding is exact: padded adjacency columns hit zero H rows, padded
    # adjacency rows are all-zero and sliced off at the end.
    if (k_p, f_in_p) != (N, f_in):
        x_p = jnp.zeros((k_p, f_in_p), f32).at[:N, :f_in].set(
            node_features.astype(f32))
    else:
        x_p = node_features.astype(f32)
    if (f_in_p, f_out_p) != (f_in, f_out):
        w_p = jnp.zeros((f_in_p, f_out_p), f32).at[:f_in, :f_out].set(W.astype(f32))
    else:
        w_p = W.astype(f32)
    # bf16 adjacency: exact for 0/1 adjacency, ~2^-9 relative rounding for
    # weighted (e.g. 1/deg-normalized) adjacency.
    # TODO(synk): cache the bf16 adjacency upstream and reuse it across layers;
    # for guaranteed-0/1 graphs a 1-byte (int8, or fp8 on v7x) stream upcast to
    # bf16 in-kernel would halve the dominant HBM bytes again.
    if (m_p, k_p) != (N, N):
        adj_p = jnp.zeros((m_p, k_p), jnp.bfloat16).at[:N, :N].set(
            adjacency_matrix.astype(jnp.bfloat16))
    else:
        adj_p = adjacency_matrix.astype(jnp.bfloat16)

    # ---- step 1: H = X @ W (trivially cheap vs. step 2; emitted bf16) -------
    t_proj = max(math.gcd(k_p, 512), 128)
    h = pl.pallas_call(
        _xw_kernel,
        out_shape=jax.ShapeDtypeStruct((k_p, f_out_p), jnp.bfloat16),
        grid_spec=pltpu.PrefetchScalarGridSpec(
            num_scalar_prefetch=0,
            grid=(k_p // t_proj,),
            in_specs=[
                pl.BlockSpec((t_proj, f_in_p), lambda i: (i, 0)),
                pl.BlockSpec((f_in_p, f_out_p), lambda i: (0, 0)),
            ],
            out_specs=pl.BlockSpec((t_proj, f_out_p), lambda i: (i, 0)),
        ),
        compiler_params=pltpu.CompilerParams(
            dimension_semantics=("parallel",),
        ),
    )(x_p, w_p)

    # ---- step 2: out = A @ H (K-tiled reduction, f32 resident accumulator) --
    if h_resident:
        kernel = partial(_agg_resident_kernel, tk)
        h_spec = pl.BlockSpec((k_p, f_out_p), lambda i, k: (0, 0))  # DMA'd once
    else:
        kernel = _agg_tiled_kernel
        h_spec = pl.BlockSpec((tk, f_out_p), lambda i, k: (k, 0))

    out_p = pl.pallas_call(
        kernel,
        out_shape=jax.ShapeDtypeStruct((m_p, f_out_p), f32),
        grid_spec=pltpu.PrefetchScalarGridSpec(
            num_scalar_prefetch=0,
            grid=(m_p // tm, k_p // tk),
            in_specs=[
                pl.BlockSpec((tm, tk), lambda i, k: (i, k)),  # bf16 adjacency tile
                h_spec,                                       # bf16 projected feats
            ],
            out_specs=pl.BlockSpec((tm, f_out_p), lambda i, k: (i, 0)),
        ),
        compiler_params=pltpu.CompilerParams(
            dimension_semantics=("parallel", "arbitrary"),
            vmem_limit_bytes=vmem_limit,
        ),
    )(adj_p, h)

    return out_p[:N, :f_out].astype(out_dtype)


def xavier_uniform(key, fan_in, fan_out, dtype=jnp.float32):
    # Matches torch.nn.init.xavier_uniform_ bound: sqrt(6 / (fan_in + fan_out))
    bound = math.sqrt(6.0 / (fan_in + fan_out))
    return jax.random.uniform(
        key, (fan_in, fan_out), dtype=dtype, minval=-bound, maxval=bound
    )


if __name__ == "__main__":
    N = 128          # number of nodes
    in_features = 64
    out_features = 32

    key = jax.random.PRNGKey(0)
    k_x, k_adj, k_w = jax.random.split(key, 3)

    node_features = jax.random.normal(k_x, (N, in_features), dtype=jnp.float32)
    # 0/1 adjacency (exactly representable in bf16).
    adjacency = (jax.random.uniform(k_adj, (N, N), dtype=jnp.float32) < 0.1).astype(
        jnp.float32
    )
    W = xavier_uniform(k_w, in_features, out_features)

    out = graphsage_conv(node_features, adjacency, W)
    out = jax.block_until_ready(out)

    # Reference check against plain JAX (same math as the PyTorch forward).
    # Tolerance reflects the single bf16 rounding of H = X @ W used for the
    # native-MXU aggregation path (adjacency 0/1 is exact in bf16).
    ref = (adjacency @ node_features) @ W
    assert out.shape == (N, out_features)
    max_err = float(jnp.max(jnp.abs(out - ref)))
    assert jnp.allclose(out, ref, atol=5e-2, rtol=5e-2), (
        f"mismatch vs reference (max abs err {max_err})"
    )

    print("KERNEL_OK")
</pallas_src>

<mosaic_0001>
module attributes {stable_mosaic.version = 11 : i64} {
  func.func @_xw_kernel(%arg0: i32, %arg1: memref<128x128xf32, #tpu.memory_space<vmem>>, %arg2: memref<128x128xf32, #tpu.memory_space<vmem>>, %arg3: memref<128x128xbf16, #tpu.memory_space<vmem>>) attributes {dimension_semantics = [#tpu.dimension_semantics<parallel>], iteration_bounds = array<i64: 1>, scalar_prefetch = 0 : i64, scratch_operands = 0 : i64, tpu.core_type = #tpu.core_type<tc>, window_params = [{transform_indices = @transform_0, window_bounds = array<i64: 128, 128>}, {pipeline_mode = #tpu.pipeline_mode<synchronous>, transform_indices = @transform_1, window_bounds = array<i64: 128, 128>}, {transform_indices = @transform_2, window_bounds = array<i64: 128, 128>}]} {
    %c0 = arith.constant 0 : index
    %c0_0 = arith.constant 0 : index
    %0 = vector.load %arg1[%c0, %c0_0] : memref<128x128xf32, #tpu.memory_space<vmem>>, vector<128x128xf32>
    %c0_1 = arith.constant 0 : index
    %c0_2 = arith.constant 0 : index
    %1 = vector.load %arg2[%c0_1, %c0_2] : memref<128x128xf32, #tpu.memory_space<vmem>>, vector<128x128xf32>
    %cst = arith.constant dense<0.000000e+00> : vector<128x128xf32>
    %2 = tpu.matmul %0, %1, %cst {dimension_numbers = #tpu.dot_dimension_numbers<[1], [0], [0], [1], [0, 0, 1, 1], [], []>} : vector<128x128xf32>, vector<128x128xf32>, vector<128x128xf32> -> vector<128x128xf32>
    %3 = arith.truncf %2 : vector<128x128xf32> to vector<128x128xbf16>
    %c0_3 = arith.constant 0 : index
    %c0_4 = arith.constant 0 : index
    %4 = vector.load %arg3[%c0_3, %c0_4] : memref<128x128xbf16, #tpu.memory_space<vmem>>, vector<128x128xbf16>
    tpu.vector_store %arg3[%c0_3, %c0_4], %3 {strides = array<i32>} : memref<128x128xbf16, #tpu.memory_space<vmem>>, vector<128x128xbf16>,
    return
  }
  func.func @transform_0(%arg0: i32) -> (i32, i32) {
    %c0_i32 = arith.constant 0 : i32
    %c0_i32_0 = arith.constant 0 : i32
    return %arg0, %c0_i32 : i32, i32
  }
  func.func @transform_1(%arg0: i32) -> (i32, i32) {
    %c0_i32 = arith.constant 0 : i32
    %c0_i32_0 = arith.constant 0 : i32
    %c0_i32_1 = arith.constant 0 : i32
    return %c0_i32, %c0_i32_0 : i32, i32
  }
  func.func @transform_2(%arg0: i32) -> (i32, i32) {
    %c0_i32 = arith.constant 0 : i32
    %c0_i32_0 = arith.constant 0 : i32
    return %arg0, %c0_i32 : i32, i32
  }
}

</mosaic_0001>

<llo_original>
// kernel: tpu_custom_call.1
$region0: #{tpu_custom_call.1}
  #allocation0 [shape = 'u32[]', space=smem, size = 0x4, offset = 0x4, fixed_abs, tag = 'smem constant byte address 0x4 - core index']
  #allocation1 [shape = 'u32[144,128]{1,0:T(1,128)}', space=vmem, size = 0x12000, scoped, tag = 'internal scratch']
  %s0 = inlined_call_operand.hbm [shape: f32[128,128], index: 0, kind: input, shape index: {}]
  %s1 = inlined_call_operand.hbm [shape: f32[128,128], index: 1, kind: input, shape index: {}]
  %s2 = inlined_call_operand.hbm [shape: bf16[128,128], index: 2, kind: output, shape index: {}]
  %s3 = sld [smem:[#allocation0]]
  $region26: #{tpu_custom_call.1} parent=0
    _
  %s5 = ssub.s32 1, %s3
  %s6 = scalar_select 0, %s5, %s3
  $region1: #{tpu_custom_call.1} parent=0
    #allocation2 [shape = 'u8[65536]{0}', space=vmem, size = 0x10000, scoped, tag = 'input window, operand 0, single buffered']
    #allocation3 [shape = 's32[1]{0}', space=sflag, size = 0x4, scoped, tag = 'scoped memory for tpu_custom_call.1']
    #allocation4 [shape = 's32[1]{0}', space=sflag, size = 0x4, scoped, tag = 'scoped memory for tpu_custom_call.1']
    #allocation5 [shape = 'u8[65536]{0}', space=vmem, size = 0x10000, scoped, tag = 'input window, operand 1, single buffered']
    #allocation6 [shape = 's32[1]{0}', space=sflag, size = 0x4, scoped, tag = 'scoped memory for tpu_custom_call.1']
    #allocation7 [shape = 'u8[32768]{0}', space=vmem, size = 0x8000, scoped, tag = 'output window, operand 0, single buffered']
    %7 = vsyncpa [#allocation3], 0
    %8 = vsyncpa [#allocation6], 0
    %9 = vsyncpa [#allocation4], 0
    // Predicated region
    $region2: #{tpu_custom_call.1} parent=1 // pred_check
      _
    $region3: #{tpu_custom_call.1} parent=1 // pred_check_branch
      %11 = sbr.rel (0) target = $region5
    $region4: #{tpu_custom_call.1} parent=1 // pred_region
      %s13 = ssub.s32 2048, 2048
      %14 = vsyncadd [#allocation3], %s13
      %s15 = sshll.u32 [#allocation2], 4
      %s16 = int_to_ptr.vmem [resolvable:$true] %s15
      %21 = dma.hbm_to_vmem [thread:$0]  %s0, 2048, %s16, [#allocation3], 128, 128, 8
    $region5: #{tpu_custom_call.1} parent=1 // pred_fallthru
      _
    // Predicated region
    $region6: #{tpu_custom_call.1} parent=1 // pred_check
      _
    $region7: #{tpu_custom_call.1} parent=1 // pred_check_branch
      %23 = sbr.rel (0) target = $region9
    $region8: #{tpu_custom_call.1} parent=1 // pred_region
      %s25 = ssub.s32 2048, 2048
      %26 = vsyncadd [#allocation6], %s25
      %s27 = sshll.u32 [#allocation5], 4
      %s28 = int_to_ptr.vmem [resolvable:$true] %s27
      %33 = dma.hbm_to_vmem [thread:$0]  %s1, 2048, %s28, [#allocation6], 128, 128, 8
    $region9: #{tpu_custom_call.1} parent=1 // pred_fallthru
      _
    // Predicated region
    $region10: #{tpu_custom_call.1} parent=1 // pred_check
      _
    $region11: #{tpu_custom_call.1} parent=1 // pred_check_branch
      %35 = sbr.rel (0) target = $region13
    $region12: #{tpu_custom_call.1} parent=1 // pred_region
      %36 = dma.done [#allocation3], 2048
    $region13: #{tpu_custom_call.1} parent=1 // pred_fallthru
      _
    // Predicated region
    $region14: #{tpu_custom_call.1} parent=1 // pred_check
      _
    $region15: #{tpu_custom_call.1} parent=1 // pred_check_branch
      %38 = sbr.rel (0) target = $region17
    $region16: #{tpu_custom_call.1} parent=1 // pred_region
      %39 = dma.done [#allocation6], 2048
    $region17: #{tpu_custom_call.1} parent=1 // pred_fallthru
      _
    %v40 = vld [vmem:[#allocation2] sm:$0xff]
    %v41 = vld [vmem:[#allocation2 + $0x8] sm:$0xff]
    %v42 = vld [vmem:[#allocation2 + $0x10] sm:$0xff]
    %v43 = vld [vmem:[#allocation2 + $0x18] sm:$0xff]
    %v44 = vld [vmem:[#allocation2 + $0x20] sm:$0xff]
    %v45 = vld [vmem:[#allocation2 + $0x28] sm:$0xff]
    %v46 = vld [vmem:[#allocation2 + $0x30] sm:$0xff]
    %v47 = vld [vmem:[#allocation2 + $0x38] sm:$0xff]
    %v48 = vld [vmem:[#allocation2 + $0x40] sm:$0xff]
    %v49 = vld [vmem:[#allocation2 + $0x48] sm:$0xff]
    %v50 = vld [vmem:[#allocation2 + $0x50] sm:$0xff]
    %v51 = vld [vmem:[#allocation2 + $0x58] sm:$0xff]
    %v52 = vld [vmem:[#allocation2 + $0x60] sm:$0xff]
    %v53 = vld [vmem:[#allocation2 + $0x68] sm:$0xff]
    %v54 = vld [vmem:[#allocation2 + $0x70] sm:$0xff]
    %v55 = vld [vmem:[#allocation2 + $0x78] sm:$0xff]
    %v56 = vld [vmem:[#allocation5] sm:$0xff]
    %v57 = vld [vmem:[#allocation5 + $0x8] sm:$0xff]
    %v58 = vld [vmem:[#allocation5 + $0x10] sm:$0xff]
    %v59 = vld [vmem:[#allocation5 + $0x18] sm:$0xff]
    %v60 = vld [vmem:[#allocation5 + $0x20] sm:$0xff]
    %v61 = vld [vmem:[#allocation5 + $0x28] sm:$0xff]
    %v62 = vld [vmem:[#allocation5 + $0x30] sm:$0xff]
    %v63 = vld [vmem:[#allocation5 + $0x38] sm:$0xff]
    %v64 = vld [vmem:[#allocation5 + $0x40] sm:$0xff]
    %v65 = vld [vmem:[#allocation5 + $0x48] sm:$0xff]
    %v66 = vld [vmem:[#allocation5 + $0x50] sm:$0xff]
    %v67 = vld [vmem:[#allocation5 + $0x58] sm:$0xff]
    %v68 = vld [vmem:[#allocation5 + $0x60] sm:$0xff]
    %v69 = vld [vmem:[#allocation5 + $0x68] sm:$0xff]
    %v70 = vld [vmem:[#allocation5 + $0x70] sm:$0xff]
    %v71 = vld [vmem:[#allocation5 + $0x78] sm:$0xff]
    %72 = vmatprep.subr.mxu0 0.0
    %73 = vmatpush1.msra.mxu0 %v71
    %74 = vmatprep.subr.mxu0 0.0
    %75 = vmatpush1.msra.mxu0 %v70
    %76 = vmatprep.subr.mxu0 0.0
    %77 = vmatpush1.msra.mxu0 %v69
    %78 = vmatprep.subr.mxu0 0.0
    %79 = vmatpush1.msra.mxu0 %v68
    %80 = vmatprep.subr.mxu0 0.0
    %81 = vmatpush1.msra.mxu0 %v67
    %82 = vmatprep.subr.mxu0 0.0
    %83 = vmatpush1.msra.mxu0 %v66
    %84 = vmatprep.subr.mxu0 0.0
    %85 = vmatpush1.msra.mxu0 %v65
    %86 = vmatprep.subr.mxu0 0.0
    %87 = vmatpush1.msra.mxu0 %v64
    %88 = vmatprep.subr.mxu0 0.0
    %89 = vmatpush1.msra.mxu0 %v63
    %90 = vmatprep.subr.mxu0 0.0
    %91 = vmatpush1.msra.mxu0 %v62
    %92 = vmatprep.subr.mxu0 0.0
    %93 = vmatpush1.msra.mxu0 %v61
    %94 = vmatprep.subr.mxu0 0.0
    %95 = vmatpush1.msra.mxu0 %v60
    %96 = vmatprep.subr.mxu0 0.0
    %97 = vmatpush1.msra.mxu0 %v59
    %98 = vmatprep.subr.mxu0 0.0
    %99 = vmatpush1.msra.mxu0 %v58
    %100 = vmatprep.subr.mxu0 0.0
    %101 = vmatpush1.msra.mxu0 %v57
    %102 = vmatprep.subr.mxu0 0.0
    %103 = vmatpush1.msra.mxu0 %v56
    %104 = vmatprep.subr.mxu0 0.0
    %105 = vmatpush2.msra.mxu0 0.0
    %106 = vmatprep.subr.mxu0 0.0
    %107 = vmatpush2.msra.mxu0 0.0
    %108 = vmatprep.subr.mxu0 0.0
    %109 = vmatpush2.msra.mxu0 0.0
    %110 = vmatprep.subr.mxu0 0.0
    %111 = vmatpush2.msra.mxu0 0.0
    %112 = vmatprep.subr.mxu0 0.0
    %113 = vmatpush2.msra.mxu0 0.0
    %114 = vmatprep.subr.mxu0 0.0
    %115 = vmatpush2.msra.mxu0 0.0
    %116 = vmatprep.subr.mxu0 0.0
    %117 = vmatpush2.msra.mxu0 0.0
    %118 = vmatprep.subr.mxu0 0.0
    %119 = vmatpush2.msra.mxu0 0.0
    %120 = vmatprep.subr.mxu0 0.0
    %121 = vmatpush2.msra.mxu0 0.0
    %122 = vmatprep.subr.mxu0 0.0
    %123 = vmatpush2.msra.mxu0 0.0
    %124 = vmatprep.subr.mxu0 0.0
    %125 = vmatpush2.msra.mxu0 0.0
    %126 = vmatprep.subr.mxu0 0.0
    %127 = vmatpush2.msra.mxu0 0.0
    %128 = vmatprep.subr.mxu0 0.0
    %129 = vmatpush2.msra.mxu0 0.0
    %130 = vmatprep.subr.mxu0 0.0
    %131 = vmatpush2.msra.mxu0 0.0
    %132 = vmatprep.subr.mxu0 0.0
    %133 = vmatpush2.msra.mxu0 0.0
    %134 = vmatprep.subr.mxu0 0.0
    %135 = vmatpush2.msra.mxu0 0.0
    %136 = vmatprep.mubr.f32.mxu0 0.0
    %137 = vmatmul.mubr.f32.gmra.mxu0 %v40
    %v138 = vpop.f32.mrf.mxu0
    %v139 = vadd.f32 0.0, %v138
    %v140 = vpop.f32.mrf.mxu0
    %141 = vmatprep.mubr.f32.mxu0 0.0
    %142 = vmatmul.mubr.f32.gmra.mxu0 %v41
    %v143 = vpop.f32.mrf.mxu0
    %v144 = vadd.f32 0.0, %v143
    %v145 = vpop.f32.mrf.mxu0
    %146 = vmatprep.mubr.f32.mxu0 0.0
    %147 = vmatmul.mubr.f32.gmra.mxu0 %v42
    %v148 = vpop.f32.mrf.mxu0
    %v149 = vadd.f32 0.0, %v148
    %v150 = vpop.f32.mrf.mxu0
    %151 = vmatprep.mubr.f32.mxu0 0.0
    %152 = vmatmul.mubr.f32.gmra.mxu0 %v43
    %v153 = vpop.f32.mrf.mxu0
    %v154 = vadd.f32 0.0, %v153
    %v155 = vpop.f32.mrf.mxu0
    %156 = vmatprep.mubr.f32.mxu0 0.0
    %157 = vmatmul.mubr.f32.gmra.mxu0 %v44
    %v158 = vpop.f32.mrf.mxu0
    %v159 = vadd.f32 0.0, %v158
    %v160 = vpop.f32.mrf.mxu0
    %161 = vmatprep.mubr.f32.mxu0 0.0
    %162 = vmatmul.mubr.f32.gmra.mxu0 %v45
    %v163 = vpop.f32.mrf.mxu0
    %v164 = vadd.f32 0.0, %v163
    %v165 = vpop.f32.mrf.mxu0
    %166 = vmatprep.mubr.f32.mxu0 0.0
    %167 = vmatmul.mubr.f32.gmra.mxu0 %v46
    %v168 = vpop.f32.mrf.mxu0
    %v169 = vadd.f32 0.0, %v168
    %v170 = vpop.f32.mrf.mxu0
    %171 = vmatprep.mubr.f32.mxu0 0.0
    %172 = vmatmul.mubr.f32.gmra.mxu0 %v47
    %v173 = vpop.f32.mrf.mxu0
    %v174 = vadd.f32 0.0, %v173
    %v175 = vpop.f32.mrf.mxu0
    %176 = vmatprep.mubr.f32.mxu0 0.0
    %177 = vmatmul.mubr.f32.gmra.mxu0 %v48
    %v178 = vpop.f32.mrf.mxu0
    %v179 = vadd.f32 0.0, %v178
    %v180 = vpop.f32.mrf.mxu0
    %181 = vmatprep.mubr.f32.mxu0 0.0
    %182 = vmatmul.mubr.f32.gmra.mxu0 %v49
    %v183 = vpop.f32.mrf.mxu0
    %v184 = vadd.f32 0.0, %v183
    %v185 = vpop.f32.mrf.mxu0
    %186 = vmatprep.mubr.f32.mxu0 0.0
    %187 = vmatmul.mubr.f32.gmra.mxu0 %v50
    %v188 = vpop.f32.mrf.mxu0
    %v189 = vadd.f32 0.0, %v188
    %v190 = vpop.f32.mrf.mxu0
    %191 = vmatprep.mubr.f32.mxu0 0.0
    %192 = vmatmul.mubr.f32.gmra.mxu0 %v51
    %v193 = vpop.f32.mrf.mxu0
    %v194 = vadd.f32 0.0, %v193
    %v195 = vpop.f32.mrf.mxu0
    %196 = vmatprep.mubr.f32.mxu0 0.0
    %197 = vmatmul.mubr.f32.gmra.mxu0 %v52
    %v198 = vpop.f32.mrf.mxu0
    %v199 = vadd.f32 0.0, %v198
    %v200 = vpop.f32.mrf.mxu0
    %201 = vmatprep.mubr.f32.mxu0 0.0
    %202 = vmatmul.mubr.f32.gmra.mxu0 %v53
    %v203 = vpop.f32.mrf.mxu0
    %v204 = vadd.f32 0.0, %v203
    %v205 = vpop.f32.mrf.mxu0
    %206 = vmatprep.mubr.f32.mxu0 0.0
    %207 = vmatmul.mubr.f32.gmra.mxu0 %v54
    %v208 = vpop.f32.mrf.mxu0
    %v209 = vadd.f32 0.0, %v208
    %v210 = vpop.f32.mrf.mxu0
    %211 = vmatprep.mubr.f32.mxu0 0.0
    %212 = vmatmul.mubr.f32.gmra.mxu0 %v55
    %v213 = vpop.f32.mrf.mxu0
    %v214 = vadd.f32 0.0, %v213
    %v215 = vpop.f32.mrf.mxu0
    %216 = vdwg.mxu0
    %v217 = vpack.c.bf16 %v144, %v139
    %v218 = vpack.c.bf16 %v154, %v149
    %v219 = vpack.c.bf16 %v164, %v159
    %v220 = vpack.c.bf16 %v174, %v169
    %v221 = vpack.c.bf16 %v184, %v179
    %v222 = vpack.c.bf16 %v194, %v189
    %v223 = vpack.c.bf16 %v204, %v199
    %v224 = vpack.c.bf16 %v214, %v209
    %v233 = vunpack.c.l.b16 %v217
    %v234 = vunpack.c.h.b16 %v217
    %v235 = vunpack.c.l.b16 %v218
    %v236 = vunpack.c.h.b16 %v218
    %v237 = vunpack.c.l.b16 %v219
    %v238 = vunpack.c.h.b16 %v219
    %v239 = vunpack.c.l.b16 %v220
    %v240 = vunpack.c.h.b16 %v220
    %v241 = vunpack.c.l.b16 %v221
    %v242 = vunpack.c.h.b16 %v221
    %v243 = vunpack.c.l.b16 %v222
    %v244 = vunpack.c.h.b16 %v222
    %v245 = vunpack.c.l.b16 %v223
    %v246 = vunpack.c.h.b16 %v223
    %v247 = vunpack.c.l.b16 %v224
    %v248 = vunpack.c.h.b16 %v224
    %v249 = vpack.c.b16 %v233, %v233
    %v250 = vpack.c.b16 %v234, %v234
    %v251 = vpack.c.b16 %v235, %v235
    %v252 = vpack.c.b16 %v236, %v236
    %v253 = vpack.c.b16 %v237, %v237
    %v254 = vpack.c.b16 %v238, %v238
    %v255 = vpack.c.b16 %v239, %v239
    %v256 = vpack.c.b16 %v240, %v240
    %v257 = vpack.c.b16 %v241, %v241
    %v258 = vpack.c.b16 %v242, %v242
    %v259 = vpack.c.b16 %v243, %v243
    %v260 = vpack.c.b16 %v244, %v244
    %v261 = vpack.c.b16 %v245, %v245
    %v262 = vpack.c.b16 %v246, %v246
    %v263 = vpack.c.b16 %v247, %v247
    %v264 = vpack.c.b16 %v248, %v248
    %281 = vst [vmem:[#allocation7] sm:$0xf] %v249
    %282 = vst [vmem:[#allocation7 + $0x4] sm:$0xf] %v250
    %283 = vst [vmem:[#allocation7 + $0x8] sm:$0xf] %v251
    %284 = vst [vmem:[#allocation7 + $0xc] sm:$0xf] %v252
    %285 = vst [vmem:[#allocation7 + $0x10] sm:$0xf] %v253
    %286 = vst [vmem:[#allocation7 + $0x14] sm:$0xf] %v254
    %287 = vst [vmem:[#allocation7 + $0x18] sm:$0xf] %v255
    %288 = vst [vmem:[#allocation7 + $0x1c] sm:$0xf] %v256
    %289 = vst [vmem:[#allocation7 + $0x20] sm:$0xf] %v257
    %290 = vst [vmem:[#allocation7 + $0x24] sm:$0xf] %v258
    %291 = vst [vmem:[#allocation7 + $0x28] sm:$0xf] %v259
    %292 = vst [vmem:[#allocation7 + $0x2c] sm:$0xf] %v260
    %293 = vst [vmem:[#allocation7 + $0x30] sm:$0xf] %v261
    %294 = vst [vmem:[#allocation7 + $0x34] sm:$0xf] %v262
    %295 = vst [vmem:[#allocation7 + $0x38] sm:$0xf] %v263
    %296 = vst [vmem:[#allocation7 + $0x3c] sm:$0xf] %v264
    // Predicated region
    $region18: #{tpu_custom_call.1} parent=1 // pred_check
      _
    $region19: #{tpu_custom_call.1} parent=1 // pred_check_branch
      %298 = sbr.rel (0) target = $region21
    $region20: #{tpu_custom_call.1} parent=1 // pred_region
      %s300 = ssub.s32 1024, 1024
      %301 = vsyncadd [#allocation4], %s300
      %s302 = sshll.u32 [#allocation7], 4
      %s303 = int_to_ptr.vmem [resolvable:$true] %s302
      %308 = dma.vmem_to_hbm [thread:$0]  %s303, 1024, %s2, [#allocation4], 64, 64, 4
    $region21: #{tpu_custom_call.1} parent=1 // pred_fallthru
      _
    // Predicated region
    $region22: #{tpu_custom_call.1} parent=1 // pred_check
      _
    $region23: #{tpu_custom_call.1} parent=1 // pred_check_branch
      %310 = sbr.rel (0) target = $region25
    $region24: #{tpu_custom_call.1} parent=1 // pred_region
      %311 = dma.done [#allocation4], 1024
    $region25: #{tpu_custom_call.1} parent=1 // pred_fallthru
      _
    %312 = vsyncpa [#allocation3], 1
    %313 = vsyncpa [#allocation6], 1
    %314 = vsyncpa [#allocation4], 1

</llo_original>
